<compile_context>
chip_gen: v6e
topology: v6e:2x2x1
jax: 0.10.0
libtpu: 0.0.40
codegen_flags: <defaults>
</compile_context>

<pallas_src>
import math

import jax
import jax.numpy as jnp
import numpy as np
from jax.experimental import pallas as pl
from jax.experimental.pallas import tpu as pltpu


def _round_up(v: int, m: int) -> int:
    return (v + m - 1) // m * m


# ---------------------------------------------------------------------------
# Pallas kernel: fused token embedding  out = feats @ W + b   (norm = Identity)
# ---------------------------------------------------------------------------
def token_embed_kernel(feats_ref, w_ref, b_ref, o_ref):
    # feats_ref: (TM, K), w_ref: (K, E), b_ref: (1, E), o_ref: (TM, E)
    acc = jnp.dot(feats_ref[...], w_ref[...], preferred_element_type=jnp.float32)
    o_ref[...] = (acc + b_ref[...]).astype(o_ref.dtype)


# ---------------------------------------------------------------------------
# Wrapper: LUnraveling layout prep + fused Pallas projection
# ---------------------------------------------------------------------------
def lfreq_embed(x, weight, bias, *, patch_size=2, tile_m=256):
    """x: (B, C, n, n) f32; weight: (K, E) with K = C*patch_size*n (stored as
    (in, out), i.e. the transpose of the PyTorch Linear weight); bias: (1, E)."""
    B, C, H, W = x.shape
    assert H == W, "LFreqEmbed expects a square spectral image"
    n = H
    slices = n // 2
    ps = patch_size
    t_half = slices // ps
    T = 2 * t_half
    K = C * ps * n
    E = weight.shape[1]
    assert weight.shape == (K, E) and bias.shape == (1, E)

    # ---- LUnraveling + flatten(1) + stack(-2): pure layout, done with XLA ----
    # "up" token i: columns [i*ps, (i+1)*ps), feature order (c, j_local, row)
    xu = x[:, :, :, :slices].reshape(B, C, n, t_half, ps)          # [b,c,row,i,jl]
    up = jnp.transpose(xu, (0, 3, 1, 4, 2)).reshape(B, t_half, K)  # [b,i,(c,jl,row)]
    # "right" token i: rows [n-slices+i*ps, ...), feature order (c, j_local, col)
    xr = x[:, :, n - slices:, :].reshape(B, C, t_half, ps, n)      # [b,c,i,jl,col]
    right = jnp.transpose(xr, (0, 2, 1, 3, 4)).reshape(B, t_half, K)
    # interleave: [up_0, right_0, up_1, right_1, ...]
    feats = jnp.stack([up, right], axis=2).reshape(B, T, K)

    # ---- fused Linear (self.layer) + Identity norm as one Pallas kernel ----
    M = B * T
    feats2 = feats.reshape(M, K)
    tm = min(tile_m, _round_up(M, 8))          # whole batch in one step if small
    Mp = _round_up(M, tm)
    if Mp != M:
        feats2 = jnp.pad(feats2, ((0, Mp - M), (0, 0)))

    out = pl.pallas_call(
        token_embed_kernel,
        out_shape=jax.ShapeDtypeStruct((Mp, E), x.dtype),
        grid=(Mp // tm,),
        in_specs=[
            pl.BlockSpec((tm, K), lambda i: (i, 0)),   # token-feature rows
            pl.BlockSpec((K, E), lambda i: (0, 0)),    # shared weight
            pl.BlockSpec((1, E), lambda i: (0, 0)),    # shared bias
        ],
        out_specs=pl.BlockSpec((tm, E), lambda i: (i, 0)),
        compiler_params=pltpu.CompilerParams(dimension_semantics=("parallel",)),
    )(feats2, weight, bias)

    return out[:M].reshape(B, T, E)


# ---------------------------------------------------------------------------
# Pure-JAX reference mirroring the PyTorch forward (explicit index gathers)
# ---------------------------------------------------------------------------
def reference(x, weight, bias, patch_size):
    B, C, n, _ = x.shape
    slices = n // 2
    ps = patch_size
    levels = []
    for i in range(slices // ps):
        # up level: columns i*ps..(i+1)*ps-1, rows ascending within each column
        rows, cols = [], []
        for j in range(i * ps, (i + 1) * ps):
            rows.extend(range(n))
            cols.extend([j] * n)
        levels.append((jnp.asarray(rows), jnp.asarray(cols)))
        # right level: rows n-slices+i*ps.., columns ascending within each row
        rows, cols = [], []
        for j in range(i * ps, (i + 1) * ps):
            rows.extend([n - slices + j] * n)
            cols.extend(range(n))
        levels.append((jnp.asarray(rows), jnp.asarray(cols)))
    gathered = [x[..., a, b].reshape(B, -1) for a, b in levels]  # level.flatten(1)
    tokens = jnp.stack(gathered, axis=-2)                        # (B, T, C*L)
    return tokens @ weight + bias.reshape(-1)                    # Linear; norm=Identity


# ---------------------------------------------------------------------------
# Main
# ---------------------------------------------------------------------------
if __name__ == "__main__":
    B, C, IMG = 2, 4, 16        # batch, in_chans, img_size (square)
    PATCH = 2                   # patch_size
    EMBED = 128                 # embed_dim (lane-dense)

    slices = IMG // 2
    T = 2 * math.ceil(slices / PATCH)       # num tokens = 8
    K = C * PATCH * IMG                     # Linear in_features = 128

    key = jax.random.PRNGKey(0)
    kx, kw, kb = jax.random.split(key, 3)
    x = jax.random.normal(kx, (B, C, IMG, IMG), jnp.float32)
    weight = jax.random.normal(kw, (K, EMBED), jnp.float32) * 0.02  # (in, out)
    bias = jax.random.normal(kb, (1, EMBED), jnp.float32) * 0.02

    out = lfreq_embed(x, weight, bias, patch_size=PATCH)
    out = jax.block_until_ready(out)
    assert out.shape == (B, T, EMBED), out.shape

    ref = jax.block_until_ready(reference(x, weight, bias, PATCH))
    np.testing.assert_allclose(np.asarray(out), np.asarray(ref),
                               rtol=1e-5, atol=1e-5)
    print("KERNEL_OK")
</pallas_src>

<mosaic_0001>
module attributes {stable_mosaic.version = 11 : i64} {
  func.func @token_embed_kernel(%arg0: i32, %arg1: memref<16x128xf32, #tpu.memory_space<vmem>>, %arg2: memref<128x128xf32, #tpu.memory_space<vmem>>, %arg3: memref<1x128xf32, #tpu.memory_space<vmem>>, %arg4: memref<16x128xf32, #tpu.memory_space<vmem>>) attributes {dimension_semantics = [#tpu.dimension_semantics<parallel>], iteration_bounds = array<i64: 1>, scalar_prefetch = 0 : i64, scratch_operands = 0 : i64, tpu.core_type = #tpu.core_type<tc>, window_params = [{transform_indices = @transform_0, window_bounds = array<i64: 16, 128>}, {pipeline_mode = #tpu.pipeline_mode<synchronous>, transform_indices = @transform_1, window_bounds = array<i64: 128, 128>}, {pipeline_mode = #tpu.pipeline_mode<synchronous>, transform_indices = @transform_2, window_bounds = array<i64: 1, 128>}, {transform_indices = @transform_3, window_bounds = array<i64: 16, 128>}]} {
    %c0 = arith.constant 0 : index
    %c0_0 = arith.constant 0 : index
    %0 = vector.load %arg1[%c0, %c0_0] : memref<16x128xf32, #tpu.memory_space<vmem>>, vector<16x128xf32>
    %c0_1 = arith.constant 0 : index
    %c0_2 = arith.constant 0 : index
    %1 = vector.load %arg2[%c0_1, %c0_2] : memref<128x128xf32, #tpu.memory_space<vmem>>, vector<128x128xf32>
    %cst = arith.constant dense<0.000000e+00> : vector<16x128xf32>
    %2 = tpu.matmul %0, %1, %cst {dimension_numbers = #tpu.dot_dimension_numbers<[1], [0], [0], [1], [0, 0, 1, 1], [], []>} : vector<16x128xf32>, vector<128x128xf32>, vector<16x128xf32> -> vector<16x128xf32>
    %c0_3 = arith.constant 0 : index
    %c0_4 = arith.constant 0 : index
    %3 = vector.load %arg3[%c0_3, %c0_4] : memref<1x128xf32, #tpu.memory_space<vmem>>, vector<1x128xf32>
    %4 = vector.broadcast %3 : vector<1x128xf32> to vector<16x128xf32>
    %5 = arith.addf %2, %4 : vector<16x128xf32>
    %c0_5 = arith.constant 0 : index
    %c0_6 = arith.constant 0 : index
    %6 = vector.load %arg4[%c0_5, %c0_6] : memref<16x128xf32, #tpu.memory_space<vmem>>, vector<16x128xf32>
    tpu.vector_store %arg4[%c0_5, %c0_6], %5 {strides = array<i32>} : memref<16x128xf32, #tpu.memory_space<vmem>>, vector<16x128xf32>,
    return
  }
  func.func @transform_0(%arg0: i32) -> (i32, i32) {
    %c0_i32 = arith.constant 0 : i32
    %c0_i32_0 = arith.constant 0 : i32
    return %arg0, %c0_i32 : i32, i32
  }
  func.func @transform_1(%arg0: i32) -> (i32, i32) {
    %c0_i32 = arith.constant 0 : i32
    %c0_i32_0 = arith.constant 0 : i32
    %c0_i32_1 = arith.constant 0 : i32
    return %c0_i32, %c0_i32_0 : i32, i32
  }
  func.func @transform_2(%arg0: i32) -> (i32, i32) {
    %c0_i32 = arith.constant 0 : i32
    %c0_i32_0 = arith.constant 0 : i32
    %c0_i32_1 = arith.constant 0 : i32
    return %c0_i32, %c0_i32_0 : i32, i32
  }
  func.func @transform_3(%arg0: i32) -> (i32, i32) {
    %c0_i32 = arith.constant 0 : i32
    %c0_i32_0 = arith.constant 0 : i32
    return %arg0, %c0_i32 : i32, i32
  }
}

</mosaic_0001>

<llo_original>
// kernel: tpu_custom_call.1
$region0: #{tpu_custom_call.1}
  #allocation0 [shape = 'u32[]', space=smem, size = 0x4, offset = 0x4, fixed_abs, tag = 'smem constant byte address 0x4 - core index']
  #allocation1 [shape = 'u32[144,128]{1,0:T(1,128)}', space=vmem, size = 0x12000, scoped, tag = 'internal scratch']
  %s0 = inlined_call_operand.hbm [shape: f32[16,128], index: 0, kind: input, shape index: {}]
  %s1 = inlined_call_operand.hbm [shape: f32[128,128], index: 1, kind: input, shape index: {}]
  %s2 = inlined_call_operand.vmem [shape: f32[1,128], index: 2, kind: input, shape index: {}]
  %s3 = inlined_call_operand.hbm [shape: f32[16,128], index: 3, kind: output, shape index: {}]
  %s4 = sld [smem:[#allocation0]]
  $region30: #{tpu_custom_call.1} parent=0
    _
  %s6 = ssub.s32 1, %s4
  %s7 = scalar_select 0, %s6, %s4
  $region1: #{tpu_custom_call.1} parent=0
    #allocation2 [shape = 'u8[8192]{0}', space=vmem, size = 0x2000, scoped, tag = 'input window, operand 0, single buffered']
    #allocation3 [shape = 's32[1]{0}', space=sflag, size = 0x4, scoped, tag = 'scoped memory for tpu_custom_call.1']
    #allocation4 [shape = 's32[1]{0}', space=sflag, size = 0x4, scoped, tag = 'scoped memory for tpu_custom_call.1']
    #allocation5 [shape = 'u8[65536]{0}', space=vmem, size = 0x10000, scoped, tag = 'input window, operand 1, single buffered']
    #allocation6 [shape = 's32[1]{0}', space=sflag, size = 0x4, scoped, tag = 'scoped memory for tpu_custom_call.1']
    #allocation7 [shape = 'u8[8192]{0}', space=vmem, size = 0x2000, scoped, tag = 'output window, operand 0, single buffered']
    %8 = vsyncpa [#allocation3], 0
    %9 = vsyncpa [#allocation6], 0
    %10 = vsyncpa [#allocation4], 0
    // Predicated region
    $region2: #{tpu_custom_call.1} parent=1 // pred_check
      _
    $region3: #{tpu_custom_call.1} parent=1 // pred_check_branch
      %12 = sbr.rel (0) target = $region5
    $region4: #{tpu_custom_call.1} parent=1 // pred_region
      %s14 = ssub.s32 256, 256
      %15 = vsyncadd [#allocation3], %s14
      %s16 = sshll.u32 [#allocation2], 4
      %s17 = int_to_ptr.vmem [resolvable:$true] %s16
      %22 = dma.hbm_to_vmem [thread:$0]  %s0, 256, %s17, [#allocation3], 128, 128, 8
    $region5: #{tpu_custom_call.1} parent=1 // pred_fallthru
      _
    // Predicated region
    $region6: #{tpu_custom_call.1} parent=1 // pred_check
      _
    $region7: #{tpu_custom_call.1} parent=1 // pred_check_branch
      %24 = sbr.rel (0) target = $region9
    $region8: #{tpu_custom_call.1} parent=1 // pred_region
      %s26 = ssub.s32 2048, 2048
      %27 = vsyncadd [#allocation6], %s26
      %s28 = sshll.u32 [#allocation5], 4
      %s29 = int_to_ptr.vmem [resolvable:$true] %s28
      %34 = dma.hbm_to_vmem [thread:$0]  %s1, 2048, %s29, [#allocation6], 128, 128, 8
    $region9: #{tpu_custom_call.1} parent=1 // pred_fallthru
      _
    // Predicated region
    $region10: #{tpu_custom_call.1} parent=1 // pred_check
      _
    $region11: #{tpu_custom_call.1} parent=1 // pred_check_branch
      %36 = sbr.rel (0) target = $region13
    $region12: #{tpu_custom_call.1} parent=1 // pred_region
      _
    $region13: #{tpu_custom_call.1} parent=1 // pred_fallthru
      _
    // Predicated region
    $region14: #{tpu_custom_call.1} parent=1 // pred_check
      _
    $region15: #{tpu_custom_call.1} parent=1 // pred_check_branch
      %38 = sbr.rel (0) target = $region17
    $region16: #{tpu_custom_call.1} parent=1 // pred_region
      %39 = dma.done [#allocation3], 256
    $region17: #{tpu_custom_call.1} parent=1 // pred_fallthru
      _
    // Predicated region
    $region18: #{tpu_custom_call.1} parent=1 // pred_check
      _
    $region19: #{tpu_custom_call.1} parent=1 // pred_check_branch
      %41 = sbr.rel (0) target = $region21
    $region20: #{tpu_custom_call.1} parent=1 // pred_region
      %42 = dma.done [#allocation6], 2048
    $region21: #{tpu_custom_call.1} parent=1 // pred_fallthru
      _
    %v43 = vld [vmem:[#allocation2] sm:$0xff]
    %v44 = vld [vmem:[#allocation2 + $0x8] sm:$0xff]
    %v45 = vld [vmem:[#allocation5] sm:$0xff]
    %v46 = vld [vmem:[#allocation5 + $0x8] sm:$0xff]
    %v47 = vld [vmem:[#allocation5 + $0x10] sm:$0xff]
    %v48 = vld [vmem:[#allocation5 + $0x18] sm:$0xff]
    %v49 = vld [vmem:[#allocation5 + $0x20] sm:$0xff]
    %v50 = vld [vmem:[#allocation5 + $0x28] sm:$0xff]
    %v51 = vld [vmem:[#allocation5 + $0x30] sm:$0xff]
    %v52 = vld [vmem:[#allocation5 + $0x38] sm:$0xff]
    %v53 = vld [vmem:[#allocation5 + $0x40] sm:$0xff]
    %v54 = vld [vmem:[#allocation5 + $0x48] sm:$0xff]
    %v55 = vld [vmem:[#allocation5 + $0x50] sm:$0xff]
    %v56 = vld [vmem:[#allocation5 + $0x58] sm:$0xff]
    %v57 = vld [vmem:[#allocation5 + $0x60] sm:$0xff]
    %v58 = vld [vmem:[#allocation5 + $0x68] sm:$0xff]
    %v59 = vld [vmem:[#allocation5 + $0x70] sm:$0xff]
    %v60 = vld [vmem:[#allocation5 + $0x78] sm:$0xff]
    %v61 = vld [vmem:[%s2] sm:$0x1]
    %v63 = vlaneseq
    %v64 = vshrl.u32 %v63, 7
    %v65 = vsub.s32 0, %v64
    %v66 = vrot.slane %v61, %v65
    %68 = vmatprep.subr.mxu0 0.0
    %69 = vmatpush1.msra.mxu0 %v60
    %70 = vmatprep.subr.mxu0 0.0
    %71 = vmatpush1.msra.mxu0 %v59
    %72 = vmatprep.subr.mxu0 0.0
    %73 = vmatpush1.msra.mxu0 %v58
    %74 = vmatprep.subr.mxu0 0.0
    %75 = vmatpush1.msra.mxu0 %v57
    %76 = vmatprep.subr.mxu0 0.0
    %77 = vmatpush1.msra.mxu0 %v56
    %78 = vmatprep.subr.mxu0 0.0
    %79 = vmatpush1.msra.mxu0 %v55
    %80 = vmatprep.subr.mxu0 0.0
    %81 = vmatpush1.msra.mxu0 %v54
    %82 = vmatprep.subr.mxu0 0.0
    %83 = vmatpush1.msra.mxu0 %v53
    %84 = vmatprep.subr.mxu0 0.0
    %85 = vmatpush1.msra.mxu0 %v52
    %86 = vmatprep.subr.mxu0 0.0
    %87 = vmatpush1.msra.mxu0 %v51
    %88 = vmatprep.subr.mxu0 0.0
    %89 = vmatpush1.msra.mxu0 %v50
    %90 = vmatprep.subr.mxu0 0.0
    %91 = vmatpush1.msra.mxu0 %v49
    %92 = vmatprep.subr.mxu0 0.0
    %93 = vmatpush1.msra.mxu0 %v48
    %94 = vmatprep.subr.mxu0 0.0
    %95 = vmatpush1.msra.mxu0 %v47
    %96 = vmatprep.subr.mxu0 0.0
    %97 = vmatpush1.msra.mxu0 %v46
    %98 = vmatprep.subr.mxu0 0.0
    %99 = vmatpush1.msra.mxu0 %v45
    %100 = vmatprep.subr.mxu0 0.0
    %101 = vmatpush2.msra.mxu0 0.0
    %102 = vmatprep.subr.mxu0 0.0
    %103 = vmatpush2.msra.mxu0 0.0
    %104 = vmatprep.subr.mxu0 0.0
    %105 = vmatpush2.msra.mxu0 0.0
    %106 = vmatprep.subr.mxu0 0.0
    %107 = vmatpush2.msra.mxu0 0.0
    %108 = vmatprep.subr.mxu0 0.0
    %109 = vmatpush2.msra.mxu0 0.0
    %110 = vmatprep.subr.mxu0 0.0
    %111 = vmatpush2.msra.mxu0 0.0
    %112 = vmatprep.subr.mxu0 0.0
    %113 = vmatpush2.msra.mxu0 0.0
    %114 = vmatprep.subr.mxu0 0.0
    %115 = vmatpush2.msra.mxu0 0.0
    %116 = vmatprep.subr.mxu0 0.0
    %117 = vmatpush2.msra.mxu0 0.0
    %118 = vmatprep.subr.mxu0 0.0
    %119 = vmatpush2.msra.mxu0 0.0
    %120 = vmatprep.subr.mxu0 0.0
    %121 = vmatpush2.msra.mxu0 0.0
    %122 = vmatprep.subr.mxu0 0.0
    %123 = vmatpush2.msra.mxu0 0.0
    %124 = vmatprep.subr.mxu0 0.0
    %125 = vmatpush2.msra.mxu0 0.0
    %126 = vmatprep.subr.mxu0 0.0
    %127 = vmatpush2.msra.mxu0 0.0
    %128 = vmatprep.subr.mxu0 0.0
    %129 = vmatpush2.msra.mxu0 0.0
    %130 = vmatprep.subr.mxu0 0.0
    %131 = vmatpush2.msra.mxu0 0.0
    %132 = vmatprep.mubr.f32.mxu0 0.0
    %133 = vmatmul.mubr.f32.gmra.mxu0 %v43
    %v134 = vpop.f32.mrf.mxu0
    %v135 = vadd.f32 %v66, %v134
    %v136 = vpop.f32.mrf.mxu0
    %137 = vmatprep.mubr.f32.mxu0 0.0
    %138 = vmatmul.mubr.f32.gmra.mxu0 %v44
    %v139 = vpop.f32.mrf.mxu0
    %v140 = vadd.f32 %v66, %v139
    %v141 = vpop.f32.mrf.mxu0
    %142 = vdwg.mxu0
    %143 = vst [vmem:[#allocation7] sm:$0xff] %v135
    %144 = vst [vmem:[#allocation7 + $0x8] sm:$0xff] %v140
    // Predicated region
    $region22: #{tpu_custom_call.1} parent=1 // pred_check
      _
    $region23: #{tpu_custom_call.1} parent=1 // pred_check_branch
      %146 = sbr.rel (0) target = $region25
    $region24: #{tpu_custom_call.1} parent=1 // pred_region
      %s148 = ssub.s32 256, 256
      %149 = vsyncadd [#allocation4], %s148
      %s150 = sshll.u32 [#allocation7], 4
      %s151 = int_to_ptr.vmem [resolvable:$true] %s150
      %156 = dma.vmem_to_hbm [thread:$0]  %s151, 256, %s3, [#allocation4], 128, 128, 8
    $region25: #{tpu_custom_call.1} parent=1 // pred_fallthru
      _
    // Predicated region
    $region26: #{tpu_custom_call.1} parent=1 // pred_check
      _
    $region27: #{tpu_custom_call.1} parent=1 // pred_check_branch
      %158 = sbr.rel (0) target = $region29
    $region28: #{tpu_custom_call.1} parent=1 // pred_region
      %159 = dma.done [#allocation4], 256
    $region29: #{tpu_custom_call.1} parent=1 // pred_fallthru
      _
    %160 = vsyncpa [#allocation3], 1
    %161 = vsyncpa [#allocation6], 1
    %162 = vsyncpa [#allocation4], 1

</llo_original>
